<compile_context>
chip_gen: v7x
topology: tpu7x:2x2x1
jax: 0.10.0
libtpu: 0.0.40
codegen_flags: <defaults>
</compile_context>

<pallas_src>
import jax
import jax.numpy as jnp
from jax.experimental import pallas as pl
from jax.experimental.pallas import tpu as pltpu


def _gelu(x):
    # GPT-2 tanh-approximation GELU (matches the reference `gelu`). Keep f32.
    c = jnp.float32(0.7978845608028654)  # sqrt(2/pi)
    return 0.5 * x * (1.0 + jnp.tanh(c * (x + 0.044715 * x * x * x)))


def _round_up(v, m):
    return -(-v // m) * m


def _pick_hidden_tile(hidden, target):
    """Largest multiple of 128 that divides `hidden` and is <= target."""
    if hidden <= target:
        return hidden
    th = (target // 128) * 128
    while th >= 128:
        if hidden % th == 0:
            return th
        th -= 128
    return hidden


def _halving_tiles(start):
    """start, start/2, ... down to 8, each rounded up to a multiple of 8."""
    vals = []
    c = max(8, start)
    while True:
        vals.append(c)
        if c <= 8:
            break
        c = max(8, ((c // 2 + 7) // 8) * 8)
    return vals


def _vmem_cap_bytes():
    """Usable VMEM budget for this chip generation (with headroom)."""
    cap = 64 * 1024 * 1024  # conservative fallback (v7x per-TC size)
    try:
        info = pltpu.get_tpu_info()
        for name in ("vmem_capacity_bytes", "vmem_size_bytes", "vmem_bytes"):
            v = getattr(info, name, None)
            if v:
                cap = int(v)
                break
    except Exception:
        pass
    return max(16 * 1024 * 1024, cap - 12 * 1024 * 1024)


def _vmem_usage(tm, th, n_embd, resident):
    """Rough VMEM working-set estimate for a (tm, th) tiling."""
    wbuf = 1 if resident else 2          # single- vs double-buffered weight tiles
    return (wbuf * n_embd * th * 2       # W_fc tile(s), bf16
            + wbuf * th * n_embd * 2     # W_proj tile(s), bf16
            + 2 * tm * n_embd * 4        # x tiles, f32 (double-buffered)
            + 2 * tm * n_embd * 4        # out tiles, f32 (double-buffered)
            + wbuf * th * 4 + 2 * n_embd * 4   # bias tiles
            + tm * n_embd * 2            # bf16 x scratch
            + 3 * tm * th * 4)           # live (tm, th) f32 intermediates


def _select_tiles(M, n_embd, hidden, tm_pref, th_pref, cap):
    """Returns (tm_eff, th_eff, weights_resident)."""
    # M-axis tile: always a multiple of 8; keep >= 2 M tiles when M >= 16 so
    # the 'parallel' axis can shard across both v7x TensorCores.
    if M >= 16:
        tm_max = min(tm_pref, _round_up(-(-M // 2), 8))
    else:
        tm_max = min(tm_pref, _round_up(M, 8))
    tm_max = max(8, tm_max)

    if th_pref is not None and th_pref >= hidden:
        th_pref = None  # full hidden requested -> auto/resident path

    if th_pref is None:
        # Prefer VMEM-resident weights (th == hidden); keep tm MXU-friendly.
        tm_floor = min(128, tm_max)
        for tm_c in _halving_tiles(tm_max):
            if tm_c < tm_floor:
                break
            if _vmem_usage(tm_c, hidden, n_embd, True) <= cap:
                return tm_c, hidden, True
        th_pref = 512  # weights don't fit -> stream them with hidden tiling

    th_eff = _pick_hidden_tile(hidden, th_pref)
    for tm_c in _halving_tiles(tm_max):
        if _vmem_usage(tm_c, th_eff, n_embd, False) <= cap:
            return tm_c, th_eff, False
    return 8, th_eff, False


def _weight_spec(shape, index_map, resident):
    """Weight BlockSpec; single-buffered when VMEM-resident (constant index)."""
    if resident and hasattr(pl, "Buffered"):
        try:
            return pl.BlockSpec(shape, index_map, pipeline_mode=pl.Buffered(1))
        except TypeError:
            pass
    return pl.BlockSpec(shape, index_map)


def _mlp_kernel(x_ref, w1_ref, b1_ref, w2_ref, b2_ref, o_ref, xb_ref):
    # x_ref:  (tm, n_embd)  f32
    # w1_ref: (n_embd, th)  bf16,  b1_ref: (1, th)      f32
    # w2_ref: (th, n_embd)  bf16,  b2_ref: (1, n_embd)  f32
    # o_ref:  (tm, n_embd)  f32  (VMEM-resident across the h axis; accumulator)
    # xb_ref: (tm, n_embd)  bf16 scratch (x cast once per M tile)
    h_idx = pl.program_id(1)

    @pl.when(h_idx == 0)
    def _():
        # Cast x to bf16 once per M tile; init output tile with the proj bias.
        xb_ref[...] = x_ref[...].astype(jnp.bfloat16)
        o_ref[...] = jnp.broadcast_to(b2_ref[...], o_ref.shape)

    # First matmul (bf16 operands, f32 accumulate) + bias; GELU in f32.
    h = jnp.dot(xb_ref[...], w1_ref[...],
                preferred_element_type=jnp.float32) + b1_ref[...]
    h = _gelu(h)
    # Second matmul: accumulate the partial (tm, th) @ (th, n_embd) directly
    # into the f32 output block (resident across the reduction axis).
    o_ref[...] += jnp.dot(h.astype(jnp.bfloat16), w2_ref[...],
                          preferred_element_type=jnp.float32)
    # TODO(synk): dropout (resid_pdrop) only applies when training=True;
    # this kernel implements the inference path (training=False).


def mlp_forward(x, w_fc, b_fc, w_proj, b_proj, *, tm=512, th=None):
    """x: (batch, seq, n_embd) float32. Returns same shape/dtype.

    tm: preferred M tile.  th: None -> auto (VMEM-resident weights when they
    fit); an int forces hidden-dim tiling with that tile size.
    """
    batch, seq, n_embd = x.shape
    hidden = w_fc.shape[1]
    M = batch * seq

    cap = _vmem_cap_bytes()
    tm_eff, th_eff, resident = _select_tiles(M, n_embd, hidden, tm, th, cap)

    grid0 = -(-M // tm_eff)           # partial edge block; no padded x copy
    n_h = hidden // th_eff
    grid = (grid0, n_h)

    x2d = x.reshape(M, n_embd)
    # bf16 weights (MXU fast path, half the HBM/VMEM bytes); biases stay f32.
    w_fc_b = w_fc.astype(jnp.bfloat16)
    w_proj_b = w_proj.astype(jnp.bfloat16)
    b_fc2 = b_fc.reshape(1, hidden).astype(jnp.float32)
    b_proj2 = b_proj.reshape(1, n_embd).astype(jnp.float32)

    weight_passes = 1 if resident else grid0
    cost = pl.CostEstimate(
        flops=4 * M * n_embd * hidden,                 # two matmuls
        transcendentals=M * hidden,                    # tanh in GELU
        bytes_accessed=(M * n_embd * 4                 # x (f32)
                        + weight_passes * (2 * n_embd * hidden * 2)  # weights bf16
                        + n_h * hidden * 4 + grid0 * n_embd * 4      # biases
                        + M * n_embd * 4),             # out (f32)
    )

    out2d = pl.pallas_call(
        _mlp_kernel,
        out_shape=jax.ShapeDtypeStruct((M, n_embd), x.dtype),
        grid_spec=pltpu.PrefetchScalarGridSpec(
            num_scalar_prefetch=0,
            grid=grid,
            in_specs=[
                pl.BlockSpec((tm_eff, n_embd), lambda i, h: (i, 0)),       # x tile
                _weight_spec((n_embd, th_eff), lambda i, h: (0, h),        # W_fc
                             resident),
                pl.BlockSpec((1, th_eff), lambda i, h: (0, h)),            # b_fc
                _weight_spec((th_eff, n_embd), lambda i, h: (h, 0),        # W_proj
                             resident),
                pl.BlockSpec((1, n_embd), lambda i, h: (0, 0)),            # b_proj
            ],
            out_specs=pl.BlockSpec((tm_eff, n_embd), lambda i, h: (i, 0)),
            scratch_shapes=[pltpu.VMEM((tm_eff, n_embd), jnp.bfloat16)],
        ),
        compiler_params=pltpu.CompilerParams(
            dimension_semantics=("parallel", "arbitrary"),
            vmem_limit_bytes=int(cap)),
        cost_estimate=cost,
    )(x2d, w_fc_b, b_fc2, w_proj_b, b_proj2)

    return out2d.reshape(batch, seq, n_embd)


def mlp_reference(x, w_fc, b_fc, w_proj, b_proj):
    """Pure f32 reference matching the PyTorch MLP forward (training=False)."""
    h = jnp.einsum("bsd,dh->bsh", x, w_fc) + b_fc
    h = _gelu(h)
    return (jnp.einsum("bsh,hd->bsd", h, w_proj) + b_proj).astype(x.dtype)


def _run_case(key, batch, seq, n_embd, *, tm=512, th=None):
    hidden = 4 * n_embd
    kx, kw1, kw2 = jax.random.split(key, 3)
    x = jax.random.normal(kx, (batch, seq, n_embd), dtype=jnp.float32)
    # Conv1D-style init: weights ~ N(0, 0.02), biases zero (GPT-2 style).
    w_fc = 0.02 * jax.random.normal(kw1, (n_embd, hidden), dtype=jnp.float32)
    b_fc = jnp.zeros((hidden,), dtype=jnp.float32)
    w_proj = 0.02 * jax.random.normal(kw2, (hidden, n_embd), dtype=jnp.float32)
    b_proj = jnp.zeros((n_embd,), dtype=jnp.float32)

    out = mlp_forward(x, w_fc, b_fc, w_proj, b_proj, tm=tm, th=th)
    out = jax.block_until_ready(out)
    ref = mlp_reference(x, w_fc, b_fc, w_proj, b_proj)

    assert out.shape == (batch, seq, n_embd)
    err = float(jnp.max(jnp.abs(out - ref)))
    assert jnp.allclose(out, ref, atol=1e-2, rtol=5e-2), err


if __name__ == "__main__":
    key = jax.random.PRNGKey(0)
    k1, k2 = jax.random.split(key)

    # Case 1 (auto): batch=2, seq=8, n_embd=32 -> hidden=128. Weights are
    # VMEM-resident; M=16 splits into 2 M tiles (exercises the megacore clamp).
    _run_case(k1, batch=2, seq=8, n_embd=32)

    # Case 2 (forced hidden tiling): M=24 with tm=16 -> partial edge M block
    # (no padded x copy) and hidden=256 tiled by th=128 -> 2 reduction steps
    # accumulating directly into the resident output block.
    _run_case(k2, batch=2, seq=12, n_embd=64, tm=16, th=128)

    print("KERNEL_OK")
</pallas_src>

<mosaic_0001>
module attributes {stable_mosaic.version = 11 : i64} {
  func.func @_mlp_kernel(%arg0: i32, %arg1: i32, %arg2: memref<8x32xf32, #tpu.memory_space<vmem>>, %arg3: memref<32x128xbf16, #tpu.memory_space<vmem>>, %arg4: memref<1x128xf32, #tpu.memory_space<vmem>>, %arg5: memref<128x32xbf16, #tpu.memory_space<vmem>>, %arg6: memref<1x32xf32, #tpu.memory_space<vmem>>, %arg7: memref<8x32xf32, #tpu.memory_space<vmem>>, %arg8: memref<8x32xbf16, #tpu.memory_space<vmem>>) attributes {dimension_semantics = [#tpu.dimension_semantics<parallel>, #tpu.dimension_semantics<arbitrary>], iteration_bounds = array<i64: 2, 1>, scalar_prefetch = 0 : i64, scratch_operands = 1 : i64, tpu.core_type = #tpu.core_type<tc>, window_params = [{transform_indices = @transform_0, window_bounds = array<i64: 8, 32>}, {pipeline_mode = #tpu.pipeline_mode<synchronous>, transform_indices = @transform_1, window_bounds = array<i64: 32, 128>}, {transform_indices = @transform_2, window_bounds = array<i64: 1, 128>}, {pipeline_mode = #tpu.pipeline_mode<synchronous>, transform_indices = @transform_3, window_bounds = array<i64: 128, 32>}, {pipeline_mode = #tpu.pipeline_mode<synchronous>, transform_indices = @transform_4, window_bounds = array<i64: 1, 32>}, {transform_indices = @transform_5, window_bounds = array<i64: 8, 32>}]} {
    %c0_i32 = arith.constant 0 : i32
    %0 = arith.cmpi eq, %arg1, %c0_i32 : i32
    %1 = arith.extui %0 : i1 to i32
    %c0_i32_0 = arith.constant 0 : i32
    %2 = arith.cmpi ne, %1, %c0_i32_0 : i32
    scf.if %2 {
      %c0_17 = arith.constant 0 : index
      %c0_18 = arith.constant 0 : index
      %28 = vector.load %arg2[%c0_17, %c0_18] : memref<8x32xf32, #tpu.memory_space<vmem>>, vector<8x32xf32>
      %29 = arith.truncf %28 : vector<8x32xf32> to vector<8x32xbf16>
      %c0_19 = arith.constant 0 : index
      %c0_20 = arith.constant 0 : index
      %30 = vector.load %arg8[%c0_19, %c0_20] : memref<8x32xbf16, #tpu.memory_space<vmem>>, vector<8x32xbf16>
      tpu.vector_store %arg8[%c0_19, %c0_20], %29 {strides = array<i32>} : memref<8x32xbf16, #tpu.memory_space<vmem>>, vector<8x32xbf16>,
      %c0_21 = arith.constant 0 : index
      %c0_22 = arith.constant 0 : index
      %31 = vector.load %arg6[%c0_21, %c0_22] : memref<1x32xf32, #tpu.memory_space<vmem>>, vector<1x32xf32>
      %32 = vector.shape_cast %31 : vector<1x32xf32> to vector<1x32xf32>
      %33 = vector.broadcast %32 : vector<1x32xf32> to vector<8x32xf32>
      %c0_23 = arith.constant 0 : index
      %c0_24 = arith.constant 0 : index
      %34 = vector.load %arg7[%c0_23, %c0_24] : memref<8x32xf32, #tpu.memory_space<vmem>>, vector<8x32xf32>
      tpu.vector_store %arg7[%c0_23, %c0_24], %33 {strides = array<i32>} : memref<8x32xf32, #tpu.memory_space<vmem>>, vector<8x32xf32>,
    } else {
    }
    %c0 = arith.constant 0 : index
    %c0_1 = arith.constant 0 : index
    %3 = vector.load %arg8[%c0, %c0_1] : memref<8x32xbf16, #tpu.memory_space<vmem>>, vector<8x32xbf16>
    %c0_2 = arith.constant 0 : index
    %c0_3 = arith.constant 0 : index
    %4 = vector.load %arg3[%c0_2, %c0_3] : memref<32x128xbf16, #tpu.memory_space<vmem>>, vector<32x128xbf16>
    %cst = arith.constant dense<0.000000e+00> : vector<8x128xf32>
    %5 = tpu.matmul %3, %4, %cst {dimension_numbers = #tpu.dot_dimension_numbers<[1], [0], [0], [1], [0, 0, 1, 1], [], []>} : vector<8x32xbf16>, vector<32x128xbf16>, vector<8x128xf32> -> vector<8x128xf32>
    %c0_4 = arith.constant 0 : index
    %c0_5 = arith.constant 0 : index
    %6 = vector.load %arg4[%c0_4, %c0_5] : memref<1x128xf32, #tpu.memory_space<vmem>>, vector<1x128xf32>
    %7 = vector.broadcast %6 : vector<1x128xf32> to vector<8x128xf32>
    %8 = arith.addf %5, %7 : vector<8x128xf32>
    %cst_6 = arith.constant 5.000000e-01 : f32
    %9 = vector.broadcast %cst_6 : f32 to vector<8x128xf32>
    %10 = arith.mulf %9, %8 : vector<8x128xf32>
    %cst_7 = arith.constant 4.471500e-02 : f32
    %11 = vector.broadcast %cst_7 : f32 to vector<8x128xf32>
    %12 = arith.mulf %11, %8 : vector<8x128xf32>
    %13 = arith.mulf %12, %8 : vector<8x128xf32>
    %14 = arith.mulf %13, %8 : vector<8x128xf32>
    %15 = arith.addf %8, %14 : vector<8x128xf32>
    %cst_8 = arith.constant 0.797884583 : f32
    %16 = vector.broadcast %cst_8 : f32 to vector<8x128xf32>
    %17 = arith.mulf %16, %15 : vector<8x128xf32>
    %18 = math.tanh %17 : vector<8x128xf32>
    %cst_9 = arith.constant 1.000000e+00 : f32
    %19 = vector.broadcast %cst_9 : f32 to vector<8x128xf32>
    %20 = arith.addf %19, %18 : vector<8x128xf32>
    %21 = arith.mulf %10, %20 : vector<8x128xf32>
    %c0_10 = arith.constant 0 : index
    %c0_11 = arith.constant 0 : index
    %22 = vector.load %arg7[%c0_10, %c0_11] : memref<8x32xf32, #tpu.memory_space<vmem>>, vector<8x32xf32>
    %23 = arith.truncf %21 : vector<8x128xf32> to vector<8x128xbf16>
    %c0_12 = arith.constant 0 : index
    %c0_13 = arith.constant 0 : index
    %24 = vector.load %arg5[%c0_12, %c0_13] : memref<128x32xbf16, #tpu.memory_space<vmem>>, vector<128x32xbf16>
    %cst_14 = arith.constant dense<0.000000e+00> : vector<8x32xf32>
    %25 = tpu.matmul %23, %24, %cst_14 {dimension_numbers = #tpu.dot_dimension_numbers<[1], [0], [0], [1], [0, 0, 1, 1], [], []>} : vector<8x128xbf16>, vector<128x32xbf16>, vector<8x32xf32> -> vector<8x32xf32>
    %26 = arith.addf %22, %25 : vector<8x32xf32>
    %c0_15 = arith.constant 0 : index
    %c0_16 = arith.constant 0 : index
    %27 = vector.load %arg7[%c0_15, %c0_16] : memref<8x32xf32, #tpu.memory_space<vmem>>, vector<8x32xf32>
    tpu.vector_store %arg7[%c0_15, %c0_16], %26 {strides = array<i32>} : memref<8x32xf32, #tpu.memory_space<vmem>>, vector<8x32xf32>,
    return
  }
  func.func @transform_0(%arg0: i32, %arg1: i32) -> (i32, i32) {
    %c0_i32 = arith.constant 0 : i32
    %c0_i32_0 = arith.constant 0 : i32
    return %arg0, %c0_i32 : i32, i32
  }
  func.func @transform_1(%arg0: i32, %arg1: i32) -> (i32, i32) {
    %c0_i32 = arith.constant 0 : i32
    %c0_i32_0 = arith.constant 0 : i32
    return %c0_i32, %arg1 : i32, i32
  }
  func.func @transform_2(%arg0: i32, %arg1: i32) -> (i32, i32) {
    %c0_i32 = arith.constant 0 : i32
    %c0_i32_0 = arith.constant 0 : i32
    return %c0_i32, %arg1 : i32, i32
  }
  func.func @transform_3(%arg0: i32, %arg1: i32) -> (i32, i32) {
    %c0_i32 = arith.constant 0 : i32
    %c0_i32_0 = arith.constant 0 : i32
    return %arg1, %c0_i32 : i32, i32
  }
  func.func @transform_4(%arg0: i32, %arg1: i32) -> (i32, i32) {
    %c0_i32 = arith.constant 0 : i32
    %c0_i32_0 = arith.constant 0 : i32
    %c0_i32_1 = arith.constant 0 : i32
    return %c0_i32, %c0_i32_0 : i32, i32
  }
  func.func @transform_5(%arg0: i32, %arg1: i32) -> (i32, i32) {
    %c0_i32 = arith.constant 0 : i32
    %c0_i32_0 = arith.constant 0 : i32
    return %arg0, %c0_i32 : i32, i32
  }
}

</mosaic_0001>

<llo_original>
// kernel: tpu_custom_call.1
$region0: #{tpu_custom_call.1}
  #allocation0 [shape = 'u32[]', space=smem, size = 0x4, offset = 0x4, fixed_abs, tag = 'smem constant byte address 0x4 - core index']
  #allocation1 [shape = 'u32[144,128]{1,0:T(1,128)}', space=vmem, size = 0x12000, scoped, tag = 'internal scratch']
  #allocation2 [shape = 'bf16[8,32]{1,0:T(8,128)(2,1)}', space=vmem, size = 0x800, scoped, tag = 'scratch operand']
  %s0 = inlined_call_operand.vmem [shape: f32[16,32], index: 0, kind: input, shape index: {}]
  %s1 = inlined_call_operand.vmem [shape: bf16[32,128], index: 1, kind: input, shape index: {}]
  %s2 = inlined_call_operand.vmem [shape: f32[1,128], index: 2, kind: input, shape index: {}]
  %s3 = inlined_call_operand.vmem [shape: bf16[128,32], index: 3, kind: input, shape index: {}]
  %s4 = inlined_call_operand.vmem [shape: f32[1,32], index: 4, kind: input, shape index: {}]
  %s5 = inlined_call_operand.hbm [shape: f32[16,32], index: 5, kind: output, shape index: {}]
  %s6 = sld [smem:[#allocation0]]
  $region57: #{tpu_custom_call.1} parent=0
    _
  %s8 = ssub.s32 1, %s6
  %s9 = scalar_select 0, %s8, %s6
  $region1: #{tpu_custom_call.1} parent=0
    #allocation3 [shape = 'u8[8192]{0}', space=vmem, size = 0x2000, scoped, tag = 'output window, operand 0']
    #allocation4 [shape = 's32[2]{0}', space=sflag, size = 0x8, scoped, tag = 'scoped memory for tpu_custom_call.1']
    %10 = vsyncpa [#allocation4], 0
    %s11 = scalar_lea.sflag [#allocation4], 1
    %12 = vsyncpa %s11, 0
    loop: start=0, step=1, limit=4
    $region2: #{tpu_custom_call.1} parent=1 // loop_pre_header
      _
    $region3: #{tpu_custom_call.1} parent=1 // loop_header
      %s14 = sphi 0, %s18
      %p15 = scmp.ge.s32.totalorder %s14, 4
      %s21 = sphi 0, %s33
      %s22 = sphi 0, %s29
      %s23 = sphi 0, %s21
      %s24 = sphi 0, %s22
      %s25 = sphi 0, %s23
      %s26 = sphi 0, %s24
      %s36 = sphi 0, %s38
      %s39 = sphi 0, %s36
      %s40 = sphi 0, %s39
      %s56 = sphi 0, %s40
      %s62 = sphi 0, %s64
      %s65 = sphi 0, %s62
      %s66 = sphi 0, %s65
      %s82 = sphi 0, %s66
      %s88 = sphi 0, %s90
      %s91 = sphi 0, %s88
      %s92 = sphi 0, %s91
      %s108 = sphi 0, %s92
      %s114 = sphi 0, %s116
      %s117 = sphi 0, %s114
      %s118 = sphi 0, %s117
      %s134 = sphi 0, %s118
      %s138 = sphi 0, %s138
      %s140 = sphi 0, %s138
      %s141 = sphi 0, %s140
      %s155 = sphi 0, %s141
      %s161 = sphi 0, %s163
      %s164 = sphi 0, %s161
      %s165 = sphi 0, %s164
      %s181 = sphi 0, %s165
    $region4: #{tpu_custom_call.1} parent=1 // loop_header_branch
      %17 = sbr.rel (%p15) target = $region8
    $region5: #{tpu_custom_call.1} parent=1 // loop_body
      %s19 = ssub.s32 %s14, 1
      %s20 = ssub.s32 %s14, 2
      %s27 = sadd.s32 1, %s22
      %p28 = scmp.ge.s32.totalorder %s27, 1
      %s29 = scalar_select %p28, 0, %s27
      %s30 = sadd.s32 1, %s21
      %s31 = scalar_select %p28, %s30, %s21
      %p32 = scmp.ge.s32.totalorder %s31, 2
      %s33 = scalar_select %p32, 0, %s31
      %s34 = ssub.s32 %s21, %s33
      %p35 = scmp.eq.s32.totalorder %s34, 0
      %s37 = sadd.s32 %s36, 1
      %s38 = scalar_select %p35, %s36, %s37
      %p41 = pneg %p35
      %p42 = scmp.eq.s32.totalorder %s14, 1
      %p43 = por %p41, %p42
      %p44 = scmp.ne.s32.totalorder %s36, %s39
      %p45 = scmp.eq.s32.totalorder %s14, 0
      %p46 = por %p44, %p45
      %p47 = scmp.ne.s32.totalorder %s36, %s39
      %p48 = scmp.eq.s32.totalorder %s19, 1
      %p49 = por %p47, %p48
      %p50 = scmp.ne.s32.totalorder %s39, %s40
      %p51 = scmp.eq.s32.totalorder %s19, 0
      %p52 = por %p50, %p51
      %p53 = scmp.ne.s32.totalorder %s39, %s40
      %p54 = scmp.eq.s32.totalorder %s20, 1
      %p55 = por %p53, %p54
      %p57 = scmp.ne.s32.totalorder %s40, %s56
      %p58 = scmp.eq.s32.totalorder %s20, 0
      %p59 = por %p57, %p58
      %s60 = ssub.s32 %s22, %s29
      %p61 = scmp.eq.s32.totalorder %s60, 0
      %s63 = sadd.s32 %s62, 1
      %s64 = scalar_select %p61, %s62, %s63
      %p67 = pneg %p61
      %p68 = scmp.eq.s32.totalorder %s14, 1
      %p69 = por %p67, %p68
      %p70 = scmp.ne.s32.totalorder %s62, %s65
      %p71 = scmp.eq.s32.totalorder %s14, 0
      %p72 = por %p70, %p71
      %p73 = scmp.ne.s32.totalorder %s62, %s65
      %p74 = scmp.eq.s32.totalorder %s19, 1
      %p75 = por %p73, %p74
      %p76 = scmp.ne.s32.totalorder %s65, %s66
      %p77 = scmp.eq.s32.totalorder %s19, 0
      %p78 = por %p76, %p77
      %p79 = scmp.ne.s32.totalorder %s65, %s66
      %p80 = scmp.eq.s32.totalorder %s20, 1
      %p81 = por %p79, %p80
      %p83 = scmp.ne.s32.totalorder %s66, %s82
      %p84 = scmp.eq.s32.totalorder %s20, 0
      %p85 = por %p83, %p84
      %s86 = ssub.s32 %s22, %s29
      %p87 = scmp.eq.s32.totalorder %s86, 0
      %s89 = sadd.s32 %s88, 1
      %s90 = scalar_select %p87, %s88, %s89
      %p93 = pneg %p87
      %p94 = scmp.eq.s32.totalorder %s14, 1
      %p95 = por %p93, %p94
      %p96 = scmp.ne.s32.totalorder %s88, %s91
      %p97 = scmp.eq.s32.totalorder %s14, 0
      %p98 = por %p96, %p97
      %p99 = scmp.ne.s32.totalorder %s88, %s91
      %p100 = scmp.eq.s32.totalorder %s19, 1
      %p101 = por %p99, %p100
      %p102 = scmp.ne.s32.totalorder %s91, %s92
      %p103 = scmp.eq.s32.totalorder %s19, 0
      %p104 = por %p102, %p103
      %p105 = scmp.ne.s32.totalorder %s91, %s92
      %p106 = scmp.eq.s32.totalorder %s20, 1
      %p107 = por %p105, %p106
      %p109 = scmp.ne.s32.totalorder %s92, %s108
      %p110 = scmp.eq.s32.totalorder %s20, 0
      %p111 = por %p109, %p110
      %s112 = ssub.s32 %s22, %s29
      %p113 = scmp.eq.s32.totalorder %s112, 0
      %s115 = sadd.s32 %s114, 1
      %s116 = scalar_select %p113, %s114, %s115
      %p119 = pneg %p113
      %p120 = scmp.eq.s32.totalorder %s14, 1
      %p121 = por %p119, %p120
      %p122 = scmp.ne.s32.totalorder %s114, %s117
      %p123 = scmp.eq.s32.totalorder %s14, 0
      %p124 = por %p122, %p123
      %p125 = scmp.ne.s32.totalorder %s114, %s117
      %p126 = scmp.eq.s32.totalorder %s19, 1
      %p127 = por %p125, %p126
      %p128 = scmp.ne.s32.totalorder %s117, %s118
      %p129 = scmp.eq.s32.totalorder %s19, 0
      %p130 = por %p128, %p129
      %p131 = scmp.ne.s32.totalorder %s117, %s118
      %p132 = scmp.eq.s32.totalorder %s20, 1
      %p133 = por %p131, %p132
      %p135 = scmp.ne.s32.totalorder %s118, %s134
      %p136 = scmp.eq.s32.totalorder %s20, 0
      %p137 = por %p135, %p136
      %s139 = sadd.s32 %s138, 1
      %p142 = scmp.eq.s32.totalorder %s14, 1
      %p143 = scmp.ne.s32.totalorder %s138, %s140
      %p144 = scmp.eq.s32.totalorder %s14, 0
      %p145 = por %p143, %p144
      %p146 = scmp.ne.s32.totalorder %s138, %s140
      %p147 = scmp.eq.s32.totalorder %s19, 1
      %p148 = por %p146, %p147
      %p149 = scmp.ne.s32.totalorder %s140, %s141
      %p150 = scmp.eq.s32.totalorder %s19, 0
      %p151 = por %p149, %p150
      %p152 = scmp.ne.s32.totalorder %s140, %s141
      %p153 = scmp.eq.s32.totalorder %s20, 1
      %p154 = por %p152, %p153
      %p156 = scmp.ne.s32.totalorder %s141, %s155
      %p157 = scmp.eq.s32.totalorder %s20, 0
      %p158 = por %p156, %p157
      %s159 = ssub.s32 %s21, %s33
      %p160 = scmp.eq.s32.totalorder %s159, 0
      %s162 = sadd.s32 %s161, 1
      %s163 = scalar_select %p160, %s161, %s162
      %p166 = pneg %p160
      %p167 = scmp.eq.s32.totalorder %s14, 1
      %p168 = por %p166, %p167
      %p169 = scmp.ne.s32.totalorder %s161, %s164
      %p170 = scmp.eq.s32.totalorder %s14, 0
      %p171 = por %p169, %p170
      %p172 = scmp.ne.s32.totalorder %s161, %s164
      %p173 = scmp.eq.s32.totalorder %s19, 1
      %p174 = por %p172, %p173
      %p175 = scmp.ne.s32.totalorder %s164, %s165
      %p176 = scmp.eq.s32.totalorder %s19, 0
      %p177 = por %p175, %p176
      %p178 = scmp.ne.s32.totalorder %s164, %s165
      %p179 = scmp.eq.s32.totalorder %s20, 1
      %p180 = por %p178, %p179
      %p182 = scmp.ne.s32.totalorder %s165, %s181
      %p183 = scmp.eq.s32.totalorder %s20, 0
      %p184 = por %p182, %p183
      %p185 = scmp.le.s32.totalorder 1, %s14
      %p186 = scmp.lt.s32.totalorder %s14, 3
      %p187 = pnand %p185, %p186
      %p188 = pneg %p187
      // Predicated region
      $region9: #{tpu_custom_call.1} parent=5 // pred_check
        _
      $region10: #{tpu_custom_call.1} parent=5 // pred_check_branch
        %190 = sbr.rel (%p187) target = $region12
      $region11: #{tpu_custom_call.1} parent=5 // pred_region
        %s191 = ssub.s32 %s14, 1
        // Predicated region
        $region13: #{tpu_custom_call.1} parent=11 // pred_check
          %p192 = pneg %p78
        $region14: #{tpu_custom_call.1} parent=11 // pred_check_branch
          %194 = sbr.rel (%p192) target = $region16
        $region15: #{tpu_custom_call.1} parent=11 // pred_region
          %p195 = scmp.lt.s32.totalorder %s24, 0
          %s196 = scalar_select %p195, %s24, 0
          %s197 = smul.addr %s196, 4
          %s198 = scalar_lea.vmem %s1, %s197
        $region16: #{tpu_custom_call.1} parent=11 // pred_fallthru
          _
        // Predicated region
        $region17: #{tpu_custom_call.1} parent=11 // pred_check
          %p199 = pneg %p104
        $region18: #{tpu_custom_call.1} parent=11 // pred_check_branch
          %201 = sbr.rel (%p199) target = $region20
        $region19: #{tpu_custom_call.1} parent=11 // pred_region
          %p202 = scmp.lt.s32.totalorder %s24, 0
          %s203 = scalar_select %p202, %s24, 0
          %s204 = scalar_lea.vmem %s2, %s203
        $region20: #{tpu_custom_call.1} parent=11 // pred_fallthru
          _
        // Predicated region
        $region21: #{tpu_custom_call.1} parent=11 // pred_check
          %p205 = pneg %p130
        $region22: #{tpu_custom_call.1} parent=11 // pred_check_branch
          %207 = sbr.rel (%p205) target = $region24
        $region23: #{tpu_custom_call.1} parent=11 // pred_region
          %s208 = smul.u32 16, %s24
          %p209 = scmp.lt.s32.totalorder %s208, 15
          %s210 = scalar_select %p209, %s208, 15
          %s211 = smul.addr %s210, 4
          %s212 = scalar_lea.vmem %s3, %s211
          %s213 = smul.u32 16, %s24
        $region24: #{tpu_custom_call.1} parent=11 // pred_fallthru
          _
        // Predicated region
        $region25: #{tpu_custom_call.1} parent=11 // pred_check
          %p214 = pneg %p151
        $region26: #{tpu_custom_call.1} parent=11 // pred_check_branch
          %216 = sbr.rel (%p214) target = $region28
        $region27: #{tpu_custom_call.1} parent=11 // pred_region
          _
        $region28: #{tpu_custom_call.1} parent=11 // pred_fallthru
          _
      $region12: #{tpu_custom_call.1} parent=5 // pred_fallthru
        _
      %p217 = scmp.lt.s32.totalorder %s14, 2
      // Predicated region
      $region29: #{tpu_custom_call.1} parent=5 // pred_check
        %p218 = pneg %p217
      $region30: #{tpu_custom_call.1} parent=5 // pred_check_branch
        %220 = sbr.rel (%p218) target = $region32
      $region31: #{tpu_custom_call.1} parent=5 // pred_region
        // Predicated region
        $region33: #{tpu_custom_call.1} parent=31 // pred_check
          %p221 = pneg %p46
        $region34: #{tpu_custom_call.1} parent=31 // pred_check_branch
          %223 = sbr.rel (%p221) target = $region36
        $region35: #{tpu_custom_call.1} parent=31 // pred_region
          %p224 = scmp.lt.s32.totalorder %s21, 1
          %s225 = scalar_select %p224, %s21, 1
          %s226 = smul.addr %s225, 8
          %s227 = scalar_lea.vmem %s0, %s226
        $region36: #{tpu_custom_call.1} parent=31 // pred_fallthru
          _
      $region32: #{tpu_custom_call.1} parent=5 // pred_fallthru
        _
      %p228 = scmp.le.s32.totalorder 1, %s14
      %p229 = scmp.lt.s32.totalorder %s14, 3
      %p230 = pnand %p228, %p229
      %p231 = pneg %p230
      // Predicated region
      $region37: #{tpu_custom_call.1} parent=5 // pred_check
        _
      $region38: #{tpu_custom_call.1} parent=5 // pred_check_branch
        %233 = sbr.rel (%p230) target = $region40
      $region39: #{tpu_custom_call.1} parent=5 // pred_region
        %s234 = ssub.s32 %s14, 1
        %p235 = scmp.lt.s32.totalorder %s23, 1
        %s236 = scalar_select %p235, %s23, 1
        %s237 = smul.addr %s236, 8
        %s238 = scalar_lea.vmem %s0, %s237
        %p239 = pneg %p52
        %p240 = pneg %p49
        %p241 = scmp.lt.s32.totalorder %s24, 0
        %s242 = scalar_select %p241, %s24, 0
        %s243 = smul.addr %s242, 4
        %s244 = scalar_lea.vmem %s1, %s243
        %p245 = pneg %p78
        %p246 = pneg %p75
        %p247 = scmp.lt.s32.totalorder %s24, 0
        %s248 = scalar_select %p247, %s24, 0
        %s249 = scalar_lea.vmem %s2, %s248
        %p250 = pneg %p104
        %p251 = pneg %p101
        %s252 = smul.u32 16, %s24
        %p253 = scmp.lt.s32.totalorder %s252, 15
        %s254 = scalar_select %p253, %s252, 15
        %s255 = smul.addr %s254, 4
        %s256 = scalar_lea.vmem %s3, %s255
        %p257 = pneg %p130
        %p258 = pneg %p127
        %p259 = pneg %p151
        %p260 = pneg %p148
        %p261 = pneg %p177
        %p262 = pneg %p174
        %s263 = sand.u32 %s164, 1
        %s264 = scalar_lea.sflag [#allocation4], %s263
        %s265 = sand.u32 %s164, 1
        %s266 = smul.addr %s265, 8
        %s267 = scalar_lea.vmem [#allocation3], %s266
        %p268 = scmp.lt.s32.totalorder %s23, 1
        %s269 = scalar_select %p268, %s23, 1
        %s270 = smul.addr %s269, 8
        %s271 = scalar_lea.vmem %s0, %s270
        %p272 = scmp.lt.s32.totalorder %s24, 0
        %s273 = scalar_select %p272, %s24, 0
        %s274 = smul.addr %s273, 4
        %s275 = scalar_lea.vmem %s1, %s274
        %p276 = scmp.lt.s32.totalorder %s24, 0
        %s277 = scalar_select %p276, %s24, 0
        %s278 = scalar_lea.vmem %s2, %s277
        %s279 = smul.u32 16, %s24
        %p280 = scmp.lt.s32.totalorder %s279, 15
        %s281 = scalar_select %p280, %s279, 15
        %s282 = smul.addr %s281, 4
        %s283 = scalar_lea.vmem %s3, %s282
        %s284 = smul.u32 16, %s24
        %p286 = scmp.eq.s32.totalorder %s24, 0
        // Predicated region
        $region41: #{tpu_custom_call.1} parent=39 // pred_check
          %p287 = pneg %p286
        $region42: #{tpu_custom_call.1} parent=39 // pred_check_branch
          %289 = sbr.rel (%p287) target = $region44
        $region43: #{tpu_custom_call.1} parent=39 // pred_region
          %v290 = vld [vmem:[%s271] sm:$0xff]
          %v291 = vpack.c.bf16 %v290, %v290
          %vm292 = vcmask 257024
          %293 = vst.msk [vmem:[#allocation2] sm:$0xf] %vm292, %v291
          %v294 = vld [vmem:[%s4] sm:$0x1]
          %v296 = vlaneseq
          %v297 = vshrl.u32 %v296, 7
          %v298 = vsub.s32 0, %v297
          %v299 = vrot.slane %v294, %v298
          %vm301 = vcmask 261120
          %302 = vst.msk [vmem:[%s267] sm:$0xff] %vm301, %v299
        $region44: #{tpu_custom_call.1} parent=39 // pred_fallthru
          _
        %v303 = vld [vmem:[#allocation2] sm:$0xf]
        %v304 = vld [vmem:[%s275] sm:$0xf]
        %v305 = vld [vmem:[%s275 + $0x4] sm:$0xf]
        %v306 = vld [vmem:[%s275 + $0x8] sm:$0xf]
        %v307 = vld [vmem:[%s275 + $0xc] sm:$0xf]
        %v308 = vld [vmem:[%s278] sm:$0x1]
        %v310 = vlaneseq
        %v311 = vshrl.u32 %v310, 7
        %v312 = vsub.s32 0, %v311
        %v313 = vrot.slane %v308, %v312
        %v319 = vunpack.c.l.b16 %v304
        %v320 = vunpack.c.l.b16 %v305
        %v321 = vunpack.c.l.b16 %v306
        %v322 = vunpack.c.l.b16 %v307
        %v323 = vpack.c.b16 %v320, %v319
        %v324 = vpack.c.b16 %v322, %v321
        %vm327 = vcmask 261120
        %v329 = vsel %vm327, %v303, 0
        %331 = vmatprep.subr.bf16.mxu0 0
        %332 = vmatpush1.bf16.msra.mxu0 %v323
        %333 = vmatprep.subr.bf16.mxu0 0
        %334 = vmatpush1.bf16.msra.mxu0 %v324
        %335 = vmatprep.subr.bf16.mxu0 0
        %336 = vmatpush1.bf16.msra.mxu0 0
        %337 = vmatprep.subr.bf16.mxu0 0
        %338 = vmatpush1.bf16.msra.mxu0 0
        %339 = vmatprep.subr.bf16.mxu0 0
        %340 = vmatpush1.bf16.msra.mxu0 0
        %341 = vmatprep.subr.bf16.mxu0 0
        %342 = vmatpush1.bf16.msra.mxu0 0
        %343 = vmatprep.subr.bf16.mxu0 0
        %344 = vmatpush1.bf16.msra.mxu0 0
        %345 = vmatprep.subr.bf16.mxu0 0
        %346 = vmatpush1.bf16.msra.mxu0 0
        %347 = vmatprep.subr.bf16.mxu0 0
        %348 = vmatpush1.bf16.msra.mxu0 0
        %349 = vmatprep.subr.bf16.mxu0 0
        %350 = vmatpush1.bf16.msra.mxu0 0
        %351 = vmatprep.subr.bf16.mxu0 0
        %352 = vmatpush1.bf16.msra.mxu0 0
        %353 = vmatprep.subr.bf16.mxu0 0
        %354 = vmatpush1.bf16.msra.mxu0 0
        %355 = vmatprep.subr.bf16.mxu0 0
        %356 = vmatpush1.bf16.msra.mxu0 0
        %357 = vmatprep.subr.bf16.mxu0 0
        %358 = vmatpush1.bf16.msra.mxu0 0
        %359 = vmatprep.subr.bf16.mxu0 0
        %360 = vmatpush1.bf16.msra.mxu0 0
        %361 = vmatprep.subr.bf16.mxu0 0
        %362 = vmatpush1.bf16.msra.mxu0 0
        %363 = vmatprep.mubr.bf16.mxu0 0
        %364 = vmatmul.mubr.bf16.gmra.mrb[0].mxu0 %v329
        %v365 = vpop.f32.mrb[0].mxu0
        %v366 = vadd.f32 %v313, %v365
        %v367 = vpop.f32.mrb[0].mxu0
        %v368 = vpop.f32.mrb[0].mxu0
        %v369 = vpop.f32.mrb[0].mxu0
        %370 = vdwg.mxu0
        %v371 = vmul.f32 %v366, 0.5
        %v372 = vmul.f32 %v366, 0.044715
        %v373 = vmul.f32 %v372, %v366
        %v374 = vmul.f32 %v373, %v366
        %v375 = vadd.f32 %v366, %v374
        %v376 = vmul.f32 %v375, 0.7978846
        %v377 = vtanh.pop %v376
        %v378 = vadd.f32 %v377, 1.0
        %v379 = vmul.f32 %v371, %v378
        %v380 = vld [vmem:[%s267] sm:$0xff]
        %v381 = vpack.c.bf16 %v379, %v379
        %v382 = vld [vmem:[%s283] sm:$0xf]
        %v383 = vld [vmem:[%s283 + $0x4] sm:$0xf]
        %v384 = vld [vmem:[%s283 + $0x8] sm:$0xf]
        %v385 = vld [vmem:[%s283 + $0xc] sm:$0xf]
        %v386 = vld [vmem:[%s283 + $0x10] sm:$0xf]
        %v387 = vld [vmem:[%s283 + $0x14] sm:$0xf]
        %v388 = vld [vmem:[%s283 + $0x18] sm:$0xf]
        %v389 = vld [vmem:[%s283 + $0x1c] sm:$0xf]
        %v390 = vld [vmem:[%s283 + $0x20] sm:$0xf]
        %v391 = vld [vmem:[%s283 + $0x24] sm:$0xf]
        %v392 = vld [vmem:[%s283 + $0x28] sm:$0xf]
        %v393 = vld [vmem:[%s283 + $0x2c] sm:$0xf]
        %v394 = vld [vmem:[%s283 + $0x30] sm:$0xf]
        %v395 = vld [vmem:[%s283 + $0x34] sm:$0xf]
        %v396 = vld [vmem:[%s283 + $0x38] sm:$0xf]
        %v397 = vld [vmem:[%s283 + $0x3c] sm:$0xf]
        %v414 = vunpack.c.l.b16 %v382
        %v415 = vunpack.c.l.b16 %v383
        %v416 = vunpack.c.l.b16 %v384
        %v417 = vunpack.c.l.b16 %v385
        %v418 = vunpack.c.l.b16 %v386
        %v419 = vunpack.c.l.b16 %v387
        %v420 = vunpack.c.l.b16 %v388
        %v421 = vunpack.c.l.b16 %v389
        %v422 = vunpack.c.l.b16 %v390
        %v423 = vunpack.c.l.b16 %v391
        %v424 = vunpack.c.l.b16 %v392
        %v425 = vunpack.c.l.b16 %v393
        %v426 = vunpack.c.l.b16 %v394
        %v427 = vunpack.c.l.b16 %v395
        %v428 = vunpack.c.l.b16 %v396
        %v429 = vunpack.c.l.b16 %v397
        %v430 = vpack.c.b16 %v415, %v414
        %v431 = vpack.c.b16 %v417, %v416
        %v432 = vpack.c.b16 %v419, %v418
        %v433 = vpack.c.b16 %v421, %v420
        %v434 = vpack.c.b16 %v423, %v422
        %v435 = vpack.c.b16 %v425, %v424
        %v436 = vpack.c.b16 %v427, %v426
        %v437 = vpack.c.b16 %v429, %v428
        %446 = vmatprep.subr.bf16.mxu0 0
        %447 = vmatpush1.bf16.msra.mxu0 %v430
        %448 = vmatprep.subr.bf16.mxu0 0
        %449 = vmatpush1.bf16.msra.mxu0 %v431
        %450 = vmatprep.subr.bf16.mxu0 0
        %451 = vmatpush1.bf16.msra.mxu0 %v432
        %452 = vmatprep.subr.bf16.mxu0 0
        %453 = vmatpush1.bf16.msra.mxu0 %v433
        %454 = vmatprep.subr.bf16.mxu0 0
        %455 = vmatpush1.bf16.msra.mxu0 %v434
        %456 = vmatprep.subr.bf16.mxu0 0
        %457 = vmatpush1.bf16.msra.mxu0 %v435
        %458 = vmatprep.subr.bf16.mxu0 0
        %459 = vmatpush1.bf16.msra.mxu0 %v436
        %460 = vmatprep.subr.bf16.mxu0 0
        %461 = vmatpush1.bf16.msra.mxu0 %v437
        %462 = vmatprep.subr.bf16.mxu0 0
        %463 = vmatpush1.bf16.msra.mxu0 0
        %464 = vmatprep.subr.bf16.mxu0 0
        %465 = vmatpush1.bf16.msra.mxu0 0
        %466 = vmatprep.subr.bf16.mxu0 0
        %467 = vmatpush1.bf16.msra.mxu0 0
        %468 = vmatprep.subr.bf16.mxu0 0
        %469 = vmatpush1.bf16.msra.mxu0 0
        %470 = vmatprep.subr.bf16.mxu0 0
        %471 = vmatpush1.bf16.msra.mxu0 0
        %472 = vmatprep.subr.bf16.mxu0 0
        %473 = vmatpush1.bf16.msra.mxu0 0
        %474 = vmatprep.subr.bf16.mxu0 0
        %475 = vmatpush1.bf16.msra.mxu0 0
        %476 = vmatprep.subr.bf16.mxu0 0
        %477 = vmatpush1.bf16.msra.mxu0 0
        %478 = vmatprep.mubr.bf16.mxu0 0
        %479 = vmatmul.mubr.bf16.gmra.mrb[0].mxu0 %v381
        %v480 = vpop.f32.mrb[0].mxu0
        %v481 = vadd.f32 0.0, %v480
        %v482 = vpop.f32.mrb[0].mxu0
        %v483 = vpop.f32.mrb[0].mxu0
        %v484 = vpop.f32.mrb[0].mxu0
        %485 = vdwg.mxu0
        %v486 = vadd.f32 %v380, %v481
        %487 = vst.msk [vmem:[%s267] sm:$0xff] %vm327, %v486
        %s488 = sand.u32 %s164, 1
        %s489 = scalar_lea.sflag [#allocation4], %s488
        %s490 = sand.u32 %s164, 1
        %s491 = smul.addr %s490, 8
        %s492 = scalar_lea.vmem [#allocation3], %s491
        // Predicated region
        $region45: #{tpu_custom_call.1} parent=39 // pred_check
          %p493 = pneg %p174
        $region46: #{tpu_custom_call.1} parent=39 // pred_check_branch
          %495 = sbr.rel (%p493) target = $region48
        $region47: #{tpu_custom_call.1} parent=39 // pred_region
          %s497 = ssub.s32 128, 128
          %498 = vsyncadd %s489, %s497
          %s499 = smul.addr %s23, 128
          %s500 = scalar_lea.hbm %s5, %s499
          %s502 = sshll.u32 %s492, 4
          %s503 = int_to_ptr.vmem [resolvable:$true] %s502
          %505 = dma.vmem_to_hbm [thread:$0]  %s503, 128, %s500, %s489
        $region48: #{tpu_custom_call.1} parent=39 // pred_fallthru
          _
      $region40: #{tpu_custom_call.1} parent=5 // pred_fallthru
        _
      %p506 = scmp.le.s32.totalorder 2, %s14
      // Predicated region
      $region49: #{tpu_custom_call.1} parent=5 // pred_check
        %p507 = pneg %p506
      $region50: #{tpu_custom_call.1} parent=5 // pred_check_branch
        %509 = sbr.rel (%p507) target = $region52
      $region51: #{tpu_custom_call.1} parent=5 // pred_region
        %s510 = ssub.s32 %s14, 2
        // Predicated region
        $region53: #{tpu_custom_call.1} parent=51 // pred_check
          %p511 = pneg %p180
        $region54: #{tpu_custom_call.1} parent=51 // pred_check_branch
          %513 = sbr.rel (%p511) target = $region56
        $region55: #{tpu_custom_call.1} parent=51 // pred_region
          %s514 = sand.u32 %s165, 1
          %s515 = scalar_lea.sflag [#allocation4], %s514
          %s516 = sand.u32 %s165, 1
          %s517 = smul.addr %s516, 8
          %s518 = scalar_lea.vmem [#allocation3], %s517
          %519 = dma.done %s515, 128
        $region56: #{tpu_custom_call.1} parent=51 // pred_fallthru
          _
      $region52: #{tpu_custom_call.1} parent=5 // pred_fallthru
        _
    $region6: #{tpu_custom_call.1} parent=1 // loop_footer
      %s18 = sadd.s32 1, %s14
    $region7: #{tpu_custom_call.1} parent=1 // loop_footer_branch
      %13 = sbr.rel target = $region3
    $region8: #{tpu_custom_call.1} parent=1 // loop_exit
      _
    %520 = vsyncpa [#allocation4], 1
    %s521 = scalar_lea.sflag [#allocation4], 1
    %522 = vsyncpa %s521, 1

</llo_original>
